<compile_context>
chip_gen: v7x
topology: tpu7x:2x2x1
jax: 0.10.0
libtpu: 0.0.40
codegen_flags: <defaults>
</compile_context>

<pallas_src>
import functools

import numpy as np
import jax
import jax.numpy as jnp
from jax.experimental import pallas as pl
from jax.experimental.pallas import tpu as pltpu

F32 = jnp.float32


# --------------------------------------------------------------------------- #
# Fused kernel body: one cosine per element, loop-invariant tables from VMEM.
# --------------------------------------------------------------------------- #
def _timestep_embedding_kernel(apply_pad_mask, t_ref, tab_ref, o_ref):
    freqs = tab_ref[0:1, :]                       # (1, dim)  per-column frequency
    phase = tab_ref[1:2, :]                       # (1, dim)  0 (cos half) / -pi/2 (sin half)
    emb = jnp.cos(t_ref[...] * freqs + phase)     # (rows, dim), single EUP op per element
    if apply_pad_mask:                            # odd dim -> exact zero in last column
        emb = emb * tab_ref[2:3, :]
    o_ref[...] = emb                              # one dense, lane-wide store


# --------------------------------------------------------------------------- #
# Tile selection: 8-aligned rows, bounded VMEM footprint, >=2 steps when B>=16.
# --------------------------------------------------------------------------- #
def _choose_block_rows(B, dim):
    def _round_up8(x):
        return ((x + 7) // 8) * 8

    # Keep the double-buffered f32 output block under ~8 MiB total
    # (fits v5e 16 MiB / v6e-v7x 32 MiB scoped VMEM defaults with headroom).
    vmem_budget_bytes = 8 * 1024 * 1024
    max_rows_vmem = max(8, (vmem_budget_bytes // (2 * 4 * max(dim, 1))) // 8 * 8)

    block_rows = min(512, max_rows_vmem)
    if B >= 16:
        # Ensure the parallel grid axis has >= 2 steps (v7x megacore sharding).
        block_rows = min(block_rows, _round_up8((B + 1) // 2))
    # Never larger than the (8-padded) batch itself.
    block_rows = max(8, min(block_rows, _round_up8(B)))
    return block_rows


# --------------------------------------------------------------------------- #
# Wrapper (matches TimestepEmbedding.forward: (B,) timesteps -> (B, dim) f32)
# --------------------------------------------------------------------------- #
def timestep_embedding(timestep, dim, max_period=10000.0):
    B = timestep.shape[0]
    half = dim // 2
    odd = (dim % 2) == 1

    # Host-side loop-invariant tables (freq, cosine phase, odd-dim pad mask).
    k = np.arange(dim)
    fidx = np.where(k < half, k, k - half).astype(np.float32)
    freqs = np.exp(-np.log(max_period) * fidx / half).astype(np.float32)
    phase = np.where(k < half, 0.0, -0.5 * np.pi).astype(np.float32)
    mask = (k < 2 * half).astype(np.float32)
    if odd:
        freqs[-1] = 0.0
        phase[-1] = 0.0
    table = jnp.asarray(np.stack([freqs, phase, mask], axis=0))   # (3, dim)

    t2 = timestep.astype(F32).reshape(B, 1)

    block_rows = _choose_block_rows(B, dim)
    B_pad = pl.cdiv(B, block_rows) * block_rows
    if B_pad != B:
        t2 = jnp.pad(t2, ((0, B_pad - B), (0, 0)))
    grid = (B_pad // block_rows,)

    kernel = functools.partial(_timestep_embedding_kernel, odd)

    out = pl.pallas_call(
        kernel,
        grid=grid,
        in_specs=[
            pl.BlockSpec((block_rows, 1), lambda i: (i, 0)),
            pl.BlockSpec((3, dim), lambda i: (0, 0)),   # VMEM-resident constants
        ],
        out_specs=pl.BlockSpec((block_rows, dim), lambda i: (i, 0)),
        out_shape=jax.ShapeDtypeStruct((B_pad, dim), F32),
        compiler_params=pltpu.CompilerParams(dimension_semantics=("parallel",)),
    )(t2, table)

    return out[:B] if B_pad != B else out


# --------------------------------------------------------------------------- #
# Pure-JAX reference (mirrors the PyTorch module) for correctness checks
# --------------------------------------------------------------------------- #
def _timestep_embedding_ref(timestep, dim, max_period=10000.0):
    half = dim // 2
    freqs = jnp.exp(-np.log(max_period) * jnp.arange(half, dtype=F32) / half)
    args = timestep.astype(F32)[:, None] * freqs[None]
    emb = jnp.concatenate([jnp.cos(args), jnp.sin(args)], axis=-1)
    if dim % 2:
        emb = jnp.concatenate([emb, jnp.zeros_like(emb[:, :1])], axis=-1)
    return emb


if __name__ == "__main__":
    key = jax.random.PRNGKey(0)
    B, dim = 2, 32
    # Deterministic small timesteps (diffusion-style integer steps).
    timestep = jax.random.randint(key, (B,), 0, 50).astype(F32)

    emb = timestep_embedding(timestep, dim)
    jax.block_until_ready(emb)
    assert emb.shape == (B, dim)
    assert bool(jnp.all(jnp.isfinite(emb)))
    ref = _timestep_embedding_ref(timestep, dim)
    assert float(jnp.max(jnp.abs(emb - ref))) < 1e-4

    # Odd-dim branch (exact zero last column via mask row).
    emb_odd = timestep_embedding(timestep, 33)
    jax.block_until_ready(emb_odd)
    assert emb_odd.shape == (B, 33)
    ref_odd = _timestep_embedding_ref(timestep, 33)
    assert float(jnp.max(jnp.abs(emb_odd - ref_odd))) < 1e-4

    # Awkward batch size exercising the padded multi-step (>=2) grid path.
    timestep_b = jax.random.randint(jax.random.PRNGKey(1), (20,), 0, 50).astype(F32)
    emb_b = timestep_embedding(timestep_b, dim)
    jax.block_until_ready(emb_b)
    assert emb_b.shape == (20, dim)
    ref_b = _timestep_embedding_ref(timestep_b, dim)
    assert float(jnp.max(jnp.abs(emb_b - ref_b))) < 1e-4

    print("KERNEL_OK")
</pallas_src>

<mosaic_0001>
module attributes {stable_mosaic.version = 11 : i64} {
  func.func @_timestep_embedding_kernel(%arg0: i32, %arg1: memref<8x1xf32, #tpu.memory_space<vmem>>, %arg2: memref<3x32xf32, #tpu.memory_space<vmem>>, %arg3: memref<8x32xf32, #tpu.memory_space<vmem>>) attributes {dimension_semantics = [#tpu.dimension_semantics<parallel>], iteration_bounds = array<i64: 1>, scalar_prefetch = 0 : i64, scratch_operands = 0 : i64, tpu.core_type = #tpu.core_type<tc>, window_params = [{transform_indices = @transform_0, window_bounds = array<i64: 8, 1>}, {pipeline_mode = #tpu.pipeline_mode<synchronous>, transform_indices = @transform_1, window_bounds = array<i64: 3, 32>}, {transform_indices = @transform_2, window_bounds = array<i64: 8, 32>}]} {
    %c0 = arith.constant 0 : index
    %c0_0 = arith.constant 0 : index
    %0 = vector.load %arg2[%c0, %c0_0] : memref<3x32xf32, #tpu.memory_space<vmem>>, vector<1x32xf32>
    %c1 = arith.constant 1 : index
    %c0_1 = arith.constant 0 : index
    %1 = vector.load %arg2[%c1, %c0_1] : memref<3x32xf32, #tpu.memory_space<vmem>>, vector<1x32xf32>
    %c0_2 = arith.constant 0 : index
    %c0_3 = arith.constant 0 : index
    %2 = vector.load %arg1[%c0_2, %c0_3] : memref<8x1xf32, #tpu.memory_space<vmem>>, vector<8x1xf32>
    %3 = vector.broadcast %2 : vector<8x1xf32> to vector<8x32xf32>
    %4 = vector.broadcast %0 : vector<1x32xf32> to vector<8x32xf32>
    %5 = arith.mulf %3, %4 : vector<8x32xf32>
    %6 = vector.broadcast %1 : vector<1x32xf32> to vector<8x32xf32>
    %7 = arith.addf %5, %6 : vector<8x32xf32>
    %8 = math.cos %7 : vector<8x32xf32>
    %c0_4 = arith.constant 0 : index
    %c0_5 = arith.constant 0 : index
    %9 = vector.load %arg3[%c0_4, %c0_5] : memref<8x32xf32, #tpu.memory_space<vmem>>, vector<8x32xf32>
    tpu.vector_store %arg3[%c0_4, %c0_5], %8 {strides = array<i32>} : memref<8x32xf32, #tpu.memory_space<vmem>>, vector<8x32xf32>,
    return
  }
  func.func @transform_0(%arg0: i32) -> (i32, i32) {
    %c0_i32 = arith.constant 0 : i32
    %c0_i32_0 = arith.constant 0 : i32
    return %arg0, %c0_i32 : i32, i32
  }
  func.func @transform_1(%arg0: i32) -> (i32, i32) {
    %c0_i32 = arith.constant 0 : i32
    %c0_i32_0 = arith.constant 0 : i32
    %c0_i32_1 = arith.constant 0 : i32
    return %c0_i32, %c0_i32_0 : i32, i32
  }
  func.func @transform_2(%arg0: i32) -> (i32, i32) {
    %c0_i32 = arith.constant 0 : i32
    %c0_i32_0 = arith.constant 0 : i32
    return %arg0, %c0_i32 : i32, i32
  }
}

</mosaic_0001>

<llo_original>
// kernel: tpu_custom_call.1
$region0: #{tpu_custom_call.1}
  #allocation0 [shape = 'u32[]', space=smem, size = 0x4, offset = 0x4, fixed_abs, tag = 'smem constant byte address 0x4 - core index']
  #allocation1 [shape = 'u32[144,128]{1,0:T(1,128)}', space=vmem, size = 0x12000, scoped, tag = 'internal scratch']
  %s0 = inlined_call_operand.vmem [shape: f32[8,1], index: 0, kind: input, shape index: {}]
  %s1 = inlined_call_operand.vmem [shape: f32[3,32], index: 1, kind: input, shape index: {}]
  %s2 = inlined_call_operand.hbm [shape: f32[8,32], index: 2, kind: output, shape index: {}]
  %s3 = sld [smem:[#allocation0]]
  $region18: #{tpu_custom_call.1} parent=0
    _
  %s5 = ssub.s32 1, %s3
  %s6 = scalar_select 0, %s5, %s3
  $region1: #{tpu_custom_call.1} parent=0
    #allocation2 [shape = 'u8[4096]{0}', space=vmem, size = 0x1000, scoped, tag = 'output window, operand 0, single buffered']
    #allocation3 [shape = 's32[1]{0}', space=sflag, size = 0x4, scoped, tag = 'scoped memory for tpu_custom_call.1']
    %7 = vsyncpa [#allocation3], 0
    // Predicated region
    $region2: #{tpu_custom_call.1} parent=1 // pred_check
      _
    $region3: #{tpu_custom_call.1} parent=1 // pred_check_branch
      %9 = sbr.rel (0) target = $region5
    $region4: #{tpu_custom_call.1} parent=1 // pred_region
      _
    $region5: #{tpu_custom_call.1} parent=1 // pred_fallthru
      _
    // Predicated region
    $region6: #{tpu_custom_call.1} parent=1 // pred_check
      _
    $region7: #{tpu_custom_call.1} parent=1 // pred_check_branch
      %11 = sbr.rel (0) target = $region9
    $region8: #{tpu_custom_call.1} parent=1 // pred_region
      _
    $region9: #{tpu_custom_call.1} parent=1 // pred_fallthru
      _
    %v12 = vld [vmem:[%s1] sm:$0x1]
    %v13 = vld [vmem:[%s1 + $0x1] sm:$0x1]
    %v14 = vld [vmem:[%s0] sm:$0xff]
    %16 = vset.pattern.permute.xlu0 0
    %17 = vperm.xlu0 %16, %v14
    %v18 = vpop.permute.xlu0 %17
    %v20 = vlaneseq
    %v21 = vshrl.u32 %v20, 7
    %v22 = vsub.s32 0, %v21
    %v23 = vrot.slane %v12, %v22
    %v24 = vmul.f32 %v18, %v23
    %v25 = vlaneseq
    %v26 = vshrl.u32 %v25, 7
    %v27 = vsub.s32 0, %v26
    %v28 = vrot.slane %v13, %v27
    %v29 = vadd.f32 %v24, %v28
    %v30 = vand.u32 2147483647, %v29
    %vm31 = vcmp.le.f32.partialorder %v30, 0.7853982
    %vm32 = vcmp.lt.s32.totalorder %v29, 0
    %v33 = vand.u32 %v29, 2139095040
    %v34 = vshrl.u32 %v33, 23
    %v35 = vsub.s32 %v34, 127
    %v36 = vand.u32 2147483647, %v29
    %v37 = vand.u32 %v36, 8388607
    %v38 = vor.u32 %v37, 8388608
    %v39 = vsub.s32 0, %v38
    %v40 = vadd.s32 %v35, 1
    %vm41 = vcmp.gt.s32.totalorder %v40, 0
    %v42 = vsel %vm41, %v40, 0
    %v43 = vshrl.u32 %v42, 5
    %v44 = vand.u32 %v42, 31
    %v45 = vsub.s32 32, %v44
    %v46 = vshrl.u32 683565275, %v45
    %v47 = vshll.u32 683565275, %v44
    %v48 = vshrl.u32 2475754826, %v45
    %v49 = vor.u32 %v47, %v48
    %v50 = vshll.u32 2475754826, %v44
    %v51 = vshrl.u32 2131351028, %v45
    %v52 = vor.u32 %v50, %v51
    %v53 = vshll.u32 2131351028, %v44
    %v54 = vshrl.u32 2102212464, %v45
    %v55 = vor.u32 %v53, %v54
    %v56 = vshll.u32 2102212464, %v44
    %v57 = vshrl.u32 920167782, %v45
    %v58 = vor.u32 %v56, %v57
    %v59 = vshll.u32 920167782, %v44
    %v60 = vshrl.u32 1326507024, %v45
    %v61 = vor.u32 %v59, %v60
    %vm62 = vcmp.lt.s32.totalorder %v43, 1
    %vm63 = vcmp.lt.s32.totalorder %v43, 2
    %vm64 = vcmp.lt.s32.totalorder %v43, 3
    %vm65 = vcmp.lt.s32.totalorder %v43, 4
    %v66 = vsel %vm62, %v46, %v49
    %v67 = vsel %vm65, %v55, 2102212464
    %v68 = vsel %vm64, %v52, %v67
    %v69 = vsel %vm63, %v66, %v68
    %v70 = vsel %vm62, %v49, %v52
    %v71 = vsel %vm65, %v58, 920167782
    %v72 = vsel %vm64, %v55, %v71
    %v73 = vsel %vm63, %v70, %v72
    %v74 = vsel %vm62, %v52, %v55
    %v75 = vsel %vm65, %v61, 1326507024
    %v76 = vsel %vm64, %v58, %v75
    %v77 = vsel %vm63, %v74, %v76
    %v78 = vshll.u32 %v38, 8
    %v79 = vmul.u32.u64.compose %v78, %v77
    %v80 = vextract.low.u32 %v79
    %v81 = vextract.high.u32 %v79
    %v82 = vmul.u32.u64.compose %v78, %v73
    %v83 = vextract.low.u32 %v82
    %v84 = vextract.high.u32 %v82
    %v85 = vmul.u32 %v78, %v69
    %v86 = vadd.s32 %v81, %v83
    %vm87 = vc.u32 %v81, %v83
    %v88 = vadd.s32 %v84, 1
    %v89 = vsel %vm87, %v88, %v84
    %v90 = vadd.s32 %v85, %v89
    %v91 = vadd.s32 %v90, 536870912
    %v92 = vshrl.u32 %v91, 30
    %v93 = vshll.u32 %v92, 30
    %v94 = vsub.s32 %v90, %v93
    %vm95 = vcmp.lt.s32.totalorder %v94, 0
    %v96 = vsub.s32 0, %v94
    %v97 = vsel %vm95, %v96, %v94
    %v98 = vclz %v97
    %v99 = vsub.s32 %v98, 2
    %vm100 = vcmp.gt.s32.totalorder 0, %v99
    %v101 = vsel %vm100, 0, %v99
    %v102 = vsub.s32 32, %v101
    %v103 = vshll.u32 %v94, %v101
    %v104 = vshrl.u32 %v86, %v102
    %v105 = vor.u32 %v103, %v104
    %v106 = vsub.s32 4294967266, %v101
    %v107 = vadd.s32 %v106, 127
    %v108 = vshll.u32 %v107, 23
    %v109 = vor.u32 4788187, %v108
    %v110 = vand.u32 2147483647, %v109
    %v112 = vcvt.s32.f32 %v105
    %v113 = vmul.f32 %v112, %v110
    %v114 = vxor.u32 %v113, 2147483648
    %v115 = vsel %vm32, %v114, %v113
    %v116 = vsub.s32 4, %v92
    %v117 = vsel %vm32, %v116, %v92
    %v118 = vsel %vm31, %v29, %v115
    %v119 = vsel %vm31, 0, %v117
    %v120 = vcosq.f32.pop %v118
    %v121 = vsinq.f32.pop %v118
    %vm122 = vweird.f32 %v29
    %v123 = vand.u32 %v119, 3
    %vm124 = vcmp.lt.s32.totalorder %v123, 2
    %vm125 = vcmp.eq.s32.totalorder %v123, 0
    %v126 = vxor.u32 %v121, 2147483648
    %v127 = vsel %vm125, %v120, %v126
    %vm128 = vcmp.eq.s32.totalorder %v123, 2
    %v129 = vxor.u32 %v120, 2147483648
    %v130 = vsel %vm128, %v129, %v121
    %v131 = vsel %vm124, %v127, %v130
    %v132 = vsel %vm122, nan, %v131
    %vm133 = vcmask 261120
    %134 = vst.msk [vmem:[#allocation2] sm:$0xff] %vm133, %v132
    // Predicated region
    $region10: #{tpu_custom_call.1} parent=1 // pred_check
      _
    $region11: #{tpu_custom_call.1} parent=1 // pred_check_branch
      %136 = sbr.rel (0) target = $region13
    $region12: #{tpu_custom_call.1} parent=1 // pred_region
      %s138 = ssub.s32 128, 128
      %139 = vsyncadd [#allocation3], %s138
      %s141 = sshll.u32 [#allocation2], 4
      %s142 = int_to_ptr.vmem [resolvable:$true] %s141
      %144 = dma.vmem_to_hbm [thread:$0]  %s142, 128, %s2, [#allocation3]
    $region13: #{tpu_custom_call.1} parent=1 // pred_fallthru
      _
    // Predicated region
    $region14: #{tpu_custom_call.1} parent=1 // pred_check
      _
    $region15: #{tpu_custom_call.1} parent=1 // pred_check_branch
      %146 = sbr.rel (0) target = $region17
    $region16: #{tpu_custom_call.1} parent=1 // pred_region
      %147 = dma.done [#allocation3], 128
    $region17: #{tpu_custom_call.1} parent=1 // pred_fallthru
      _
    %148 = vsyncpa [#allocation3], 1

</llo_original>
